<compile_context>
chip_gen: v6e
topology: v6e:2x2x1
jax: 0.10.0
libtpu: 0.0.40
codegen_flags: <defaults>
</compile_context>

<pallas_src>
import numpy as np
import jax
import jax.numpy as jnp
from jax.experimental import pallas as pl
from jax.experimental.pallas import tpu as pltpu

L2_EPS = 1e-12          # l2normalize eps in the PyTorch code
POWER_ITERATIONS = 1    # SpectralNorm default
LANE = 128


def _round_up(x, m):
    return ((x + m - 1) // m) * m


# --------------- Kernel A: power iteration -> u, v, 1/sigma (exact f32, VPU) ---------------
def _spectral_norm_kernel(w_ref, u_ref, v_ref, u_out_ref, v_out_ref, s_ref):
    """w_ref: (Cout, K) = weight_bar.view(height, -1); u_ref: (Cout, 1); v_ref: (1, K)."""
    w = w_ref[...]
    u = u_ref[...]
    v = v_ref[...]

    def l2normalize(a):
        nrm = jnp.sqrt(jnp.sum(a * a, keepdims=True))          # (1, 1)
        return a * (1.0 / (nrm + L2_EPS))                       # scalar reciprocal-multiply

    for _ in range(POWER_ITERATIONS):
        v = l2normalize(jnp.sum(w * u, axis=0, keepdims=True))  # l2norm(W^T u) -> (1, K)
        u = l2normalize(jnp.sum(w * v, axis=1, keepdims=True))  # l2norm(W v)   -> (Cout, 1)

    wv = jnp.sum(w * v, axis=1, keepdims=True)                  # W v -> (Cout, 1)
    sigma = jnp.sum(u * wv, keepdims=True)                      # (1, 1)

    u_out_ref[...] = u
    v_out_ref[...] = v
    s_ref[...] = 1.0 / sigma          # sigma is folded into Kernel B as a post-matmul scale


# ---------------- Kernel B: conv3x3 (s=1, p=1) with W_bar and post-scale 1/sigma ----------------
def _sn_conv3x3_kernel(x_ref, w_ref, b_ref, s_ref, o_ref, patch_ref):
    """One batch element per grid step.

    x_ref:     (1, H+2, W+2, Cin)     bf16  spatially zero-padded in the wrapper
    w_ref:     (9*Cin_pad, Cout_pad)  bf16  im2col W_bar (zero rows/cols for the padding)
    b_ref:     (1, Cout_pad)          f32   bias (zero tail)
    s_ref:     (1, 1)                 f32   1/sigma
    o_ref:     (1, Cout, H*W)         f32   NCHW-flat output (lane-dense stores)
    patch_ref: (H*W, 9*Cin_pad)       bf16  im2col scratch, 128-wide lane-aligned tap slots
    """
    _, Hp, Wp, Cin = x_ref.shape
    H, W = Hp - 2, Wp - 2
    M = H * W
    Cin_pad = patch_ref.shape[1] // 9
    Cout = o_ref.shape[1]

    # If Cin is not lane-aligned, each 128-wide tap slot has padding columns.  Their weight
    # rows are zero, but uninitialized VMEM may hold NaN bit patterns (NaN * 0 = NaN), and
    # scratch is per-core under "parallel" megacore sharding, so a program_id==0 guard is
    # not sufficient -- re-zero every step (cheap full-lane stores; branch is static and
    # disappears entirely when Cin is already a multiple of 128).
    if Cin_pad != Cin:
        patch_ref[...] = jnp.zeros_like(patch_ref)

    # im2col: every tap writes its Cin channels at a lane-aligned (multiple-of-128) column
    # offset, so the conv is a single MXU matmul with a bf16 patch.
    xp = x_ref[0]                                            # (H+2, W+2, Cin) bf16
    for kh in range(3):
        for kw in range(3):
            c0 = (kh * 3 + kw) * Cin_pad
            patch_ref[:, c0:c0 + Cin] = xp[kh:kh + H, kw:kw + W, :].reshape(M, Cin)

    acc = jnp.dot(patch_ref[...], w_ref[...],
                  preferred_element_type=jnp.float32)        # (M, Cout_pad), f32 accumulate
    res = acc * s_ref[...] + b_ref[...]                      # fold 1/sigma + bias (VPU, hidden under MXU)
    o_ref[0] = jnp.transpose(res)[:Cout, :]                  # (Cout, M): lane-dense, NCHW layout


# ------------------------------------------ wrapper ------------------------------------------
def spectral_norm_conv2d(x_nchw, weight, bias, u, v):
    """SpectralNorm(nn.Conv2d(Cin, Cout, 3, stride=1, padding=1)).forward(x).

    Returns (y_nchw, u_new, v_new).
    """
    # TODO(synk): PyTorch SpectralNorm mutates the u/v buffers (and module.weight) in place
    # via setattr; Pallas kernels are functional, so the updated u/v are returned instead.
    N, Cin, H, W = x_nchw.shape
    Cout = weight.shape[0]
    K = Cin * 9
    M = H * W
    Cin_pad = _round_up(Cin, LANE)
    Cout_pad = _round_up(Cout, LANE)

    vmem = pl.BlockSpec(memory_space=pltpu.MemorySpace.VMEM)

    # ---- Kernel A: power iteration; emits only u, v, 1/sigma (no normalized-weight HBM trip) ----
    w2d = weight.reshape(Cout, K).astype(jnp.float32)        # == w.view(height, -1)
    u_col = u.reshape(Cout, 1).astype(jnp.float32)
    v_row = v.reshape(1, K).astype(jnp.float32)
    u_new, v_new, sig_inv = pl.pallas_call(
        _spectral_norm_kernel,
        out_shape=(
            jax.ShapeDtypeStruct((Cout, 1), jnp.float32),
            jax.ShapeDtypeStruct((1, K), jnp.float32),
            jax.ShapeDtypeStruct((1, 1), jnp.float32),
        ),
        in_specs=[vmem, vmem, vmem],
        out_specs=(vmem, vmem, vmem),
    )(w2d, u_col, v_row)

    # ---- Kernel B inputs (layout-only work on W_bar; sigma is NOT applied here) ----
    # im2col weight: row = (kh*3 + kw)*Cin_pad + ci, col = co; padded rows/cols are zero.
    w_tap = jnp.transpose(weight, (2, 3, 1, 0)).astype(jnp.bfloat16)            # (3,3,Cin,Cout)
    w_tap = jnp.pad(w_tap, ((0, 0), (0, 0), (0, Cin_pad - Cin), (0, Cout_pad - Cout)))
    w_mat = w_tap.reshape(9 * Cin_pad, Cout_pad)
    b_row = jnp.pad(bias.astype(jnp.float32), (0, Cout_pad - Cout)).reshape(1, Cout_pad)

    # bf16 activations (halves HBM->VMEM traffic); the 1-pixel halo zero-pad is done once in
    # HBM so the kernel has no pad scratch, no halo zeroing and no interior copy per step.
    x_nhwc = jnp.transpose(x_nchw, (0, 2, 3, 1)).astype(jnp.bfloat16)
    xp = jnp.pad(x_nhwc, ((0, 0), (1, 1), (1, 1), (0, 0)))                      # (N, H+2, W+2, Cin)

    grid_spec = pltpu.PrefetchScalarGridSpec(
        num_scalar_prefetch=0,
        grid=(N,),
        in_specs=[
            pl.BlockSpec((1, H + 2, W + 2, Cin), lambda n: (n, 0, 0, 0)),
            pl.BlockSpec((9 * Cin_pad, Cout_pad), lambda n: (0, 0)),   # same block -> VMEM-resident
            pl.BlockSpec((1, Cout_pad), lambda n: (0, 0)),
            pl.BlockSpec((1, 1), lambda n: (0, 0)),
        ],
        out_specs=pl.BlockSpec((1, Cout, M), lambda n: (n, 0, 0)),
        scratch_shapes=[pltpu.VMEM((M, 9 * Cin_pad), jnp.bfloat16)],   # bf16 im2col buffer
    )

    # VMEM budget: 2x the actual need, clamped to [32 MiB, 64 MiB] so one number is valid on
    # v5e/v6e (128 MiB physical) and v7x (64 MiB physical) alike.
    # TODO(synk): for large H*W / Cin that would overflow v7x's 64 MiB VMEM, add a spatial
    # row-tile grid axis with a 1-row halo (second "parallel" axis) instead of raising this.
    need = (M * 9 * Cin_pad * 2                                   # patch scratch (bf16)
            + 2 * ((H + 2) * (W + 2) * Cin * 2 + Cout * M * 4)    # double-buffered x / out blocks
            + 9 * Cin_pad * Cout_pad * 2 + Cout_pad * 4           # resident weight + bias
            + (1 << 20))                                          # slack
    vmem_limit = int(min(64 * 1024 * 1024, max(32 * 1024 * 1024, 2 * need)))

    flops = 2 * N * M * (9 * Cin_pad) * Cout_pad
    bytes_accessed = (N * (H + 2) * (W + 2) * Cin * 2 + 9 * Cin_pad * Cout_pad * 2
                      + Cout_pad * 4 + 4 + N * Cout * M * 4)
    y = pl.pallas_call(
        _sn_conv3x3_kernel,
        out_shape=jax.ShapeDtypeStruct((N, Cout, M), jnp.float32),
        grid_spec=grid_spec,
        compiler_params=pltpu.CompilerParams(
            dimension_semantics=("parallel",),    # batch axis shards across TCs (v7x megacore)
            vmem_limit_bytes=vmem_limit,
        ),
        cost_estimate=pl.CostEstimate(flops=flops, transcendentals=0,
                                      bytes_accessed=bytes_accessed),
    )(xp, w_mat, b_row, sig_inv)

    # (N, Cout, H*W) is already NCHW-flat: the reshape is free (no transpose / extra HBM pass).
    y_nchw = y.reshape(N, Cout, H, W)
    return y_nchw, u_new.reshape(Cout), v_new.reshape(K)


# ------------------------------------ pure-numpy reference ------------------------------------
def reference_spectral_norm_conv(x, w, b, u0, v0, power_iterations=POWER_ITERATIONS):
    x = np.asarray(x, np.float32)
    w = np.asarray(w, np.float32)
    b = np.asarray(b, np.float32)
    Cout = w.shape[0]
    Wm = w.reshape(Cout, -1)

    def l2n(a):
        return a / (np.linalg.norm(a) + L2_EPS)

    u = np.asarray(u0, np.float32)
    v = np.asarray(v0, np.float32)
    for _ in range(power_iterations):
        v = l2n(Wm.T @ u)
        u = l2n(Wm @ v)
    sigma = float(u @ (Wm @ v))
    wn = w / sigma

    N, Cin, H, W = x.shape
    xp = np.zeros((N, Cin, H + 2, W + 2), np.float32)
    xp[:, :, 1:H + 1, 1:W + 1] = x
    out = np.zeros((N, Cout, H, W), np.float32)
    for kh in range(3):
        for kw in range(3):
            out += np.einsum("nihw,oi->nohw",
                             xp[:, :, kh:kh + H, kw:kw + W], wn[:, :, kh, kw])
    out += b.reshape(1, -1, 1, 1)
    return out, u, v


if __name__ == "__main__":
    N, Cin, Cout, H, W = 2, 4, 8, 16, 16
    K = Cin * 9

    key = jax.random.PRNGKey(0)
    ks = jax.random.split(key, 5)
    weight = jax.random.normal(ks[0], (Cout, Cin, 3, 3), jnp.float32) * 0.2   # weight_bar
    bias = jax.random.normal(ks[1], (Cout,), jnp.float32) * 0.1
    u0 = jax.random.normal(ks[2], (Cout,), jnp.float32)
    v0 = jax.random.normal(ks[3], (K,), jnp.float32)
    # SpectralNorm._make_params() l2-normalizes u and v at init.
    u0 = u0 / (jnp.sqrt(jnp.sum(u0 * u0)) + L2_EPS)
    v0 = v0 / (jnp.sqrt(jnp.sum(v0 * v0)) + L2_EPS)
    x = jax.random.normal(ks[4], (N, Cin, H, W), jnp.float32)

    y, u1, v1 = spectral_norm_conv2d(x, weight, bias, u0, v0)
    y = jax.block_until_ready(y)

    ref_y, ref_u, ref_v = reference_spectral_norm_conv(
        np.asarray(x), np.asarray(weight), np.asarray(bias),
        np.asarray(u0), np.asarray(v0))

    assert y.shape == (N, Cout, H, W), y.shape
    np.testing.assert_allclose(np.asarray(u1), ref_u, rtol=1e-3, atol=1e-4)
    np.testing.assert_allclose(np.asarray(v1), ref_v, rtol=1e-3, atol=1e-4)
    np.testing.assert_allclose(np.asarray(y), ref_y, rtol=2e-2, atol=2e-2)

    print("KERNEL_OK")
</pallas_src>

<mosaic_0001>
module attributes {stable_mosaic.version = 11 : i64} {
  func.func @_spectral_norm_kernel(%arg0: memref<8x36xf32, #tpu.memory_space<vmem>>, %arg1: memref<8x1xf32, #tpu.memory_space<vmem>>, %arg2: memref<1x36xf32, #tpu.memory_space<vmem>>, %arg3: memref<8x1xf32, #tpu.memory_space<vmem>>, %arg4: memref<1x36xf32, #tpu.memory_space<vmem>>, %arg5: memref<1x1xf32, #tpu.memory_space<vmem>>) attributes {dimension_semantics = [], scalar_prefetch = 0 : i64, scratch_operands = 0 : i64, tpu.core_type = #tpu.core_type<tc>} {
    %c0 = arith.constant 0 : index
    %c0_0 = arith.constant 0 : index
    %0 = vector.load %arg0[%c0, %c0_0] : memref<8x36xf32, #tpu.memory_space<vmem>>, vector<8x36xf32>
    %c0_1 = arith.constant 0 : index
    %c0_2 = arith.constant 0 : index
    %1 = vector.load %arg1[%c0_1, %c0_2] : memref<8x1xf32, #tpu.memory_space<vmem>>, vector<8x1xf32>
    %2 = vector.broadcast %1 : vector<8x1xf32> to vector<8x36xf32>
    %3 = arith.mulf %0, %2 : vector<8x36xf32>
    %cst = arith.constant dense<0.000000e+00> : vector<36xf32>
    %4 = vector.multi_reduction <add>, %3, %cst [0] : vector<8x36xf32> to vector<36xf32>
    %5 = vector.shape_cast %4 : vector<36xf32> to vector<1x36xf32>
    %6 = arith.mulf %5, %5 : vector<1x36xf32>
    %7 = vector.shape_cast %6 : vector<1x36xf32> to vector<1x1x36xf32>
    %cst_3 = arith.constant dense<0.000000e+00> : vector<1xf32>
    %8 = vector.multi_reduction <add>, %7, %cst_3 [1, 2] : vector<1x1x36xf32> to vector<1xf32>
    %9 = vector.shape_cast %8 : vector<1xf32> to vector<1x1x1xf32>
    %10 = vector.extract %9[0, 0, 0] : f32 from vector<1x1x1xf32>
    %11 = vector.broadcast %10 : f32 to vector<1x1xf32>
    %12 = math.sqrt %11 : vector<1x1xf32>
    %cst_4 = arith.constant 9.99999996E-13 : f32
    %13 = vector.broadcast %cst_4 : f32 to vector<1x1xf32>
    %14 = arith.addf %12, %13 : vector<1x1xf32>
    %cst_5 = arith.constant 1.000000e+00 : f32
    %15 = vector.broadcast %cst_5 : f32 to vector<1x1xf32>
    %16 = arith.divf %15, %14 : vector<1x1xf32>
    %17 = vector.broadcast %16 : vector<1x1xf32> to vector<1x36xf32>
    %18 = arith.mulf %5, %17 : vector<1x36xf32>
    %19 = vector.broadcast %18 : vector<1x36xf32> to vector<8x36xf32>
    %20 = arith.mulf %0, %19 : vector<8x36xf32>
    %cst_6 = arith.constant dense<0.000000e+00> : vector<8xf32>
    %21 = vector.multi_reduction <add>, %20, %cst_6 [1] : vector<8x36xf32> to vector<8xf32>
    %22 = vector.shape_cast %21 : vector<8xf32> to vector<8x1xf32>
    %23 = arith.mulf %22, %22 : vector<8x1xf32>
    %24 = vector.shape_cast %23 : vector<8x1xf32> to vector<1x8x1xf32>
    %cst_7 = arith.constant dense<0.000000e+00> : vector<1xf32>
    %25 = vector.multi_reduction <add>, %24, %cst_7 [1, 2] : vector<1x8x1xf32> to vector<1xf32>
    %26 = vector.shape_cast %25 : vector<1xf32> to vector<1x1x1xf32>
    %27 = vector.extract %26[0, 0, 0] : f32 from vector<1x1x1xf32>
    %28 = vector.broadcast %27 : f32 to vector<1x1xf32>
    %29 = math.sqrt %28 : vector<1x1xf32>
    %cst_8 = arith.constant 9.99999996E-13 : f32
    %30 = vector.broadcast %cst_8 : f32 to vector<1x1xf32>
    %31 = arith.addf %29, %30 : vector<1x1xf32>
    %cst_9 = arith.constant 1.000000e+00 : f32
    %32 = vector.broadcast %cst_9 : f32 to vector<1x1xf32>
    %33 = arith.divf %32, %31 : vector<1x1xf32>
    %34 = vector.broadcast %33 : vector<1x1xf32> to vector<8x1xf32>
    %35 = arith.mulf %22, %34 : vector<8x1xf32>
    %36 = vector.broadcast %18 : vector<1x36xf32> to vector<8x36xf32>
    %37 = arith.mulf %0, %36 : vector<8x36xf32>
    %cst_10 = arith.constant dense<0.000000e+00> : vector<8xf32>
    %38 = vector.multi_reduction <add>, %37, %cst_10 [1] : vector<8x36xf32> to vector<8xf32>
    %39 = vector.shape_cast %38 : vector<8xf32> to vector<8x1xf32>
    %40 = arith.mulf %35, %39 : vector<8x1xf32>
    %41 = vector.shape_cast %40 : vector<8x1xf32> to vector<1x8x1xf32>
    %cst_11 = arith.constant dense<0.000000e+00> : vector<1xf32>
    %42 = vector.multi_reduction <add>, %41, %cst_11 [1, 2] : vector<1x8x1xf32> to vector<1xf32>
    %43 = vector.shape_cast %42 : vector<1xf32> to vector<1x1x1xf32>
    %44 = vector.extract %43[0, 0, 0] : f32 from vector<1x1x1xf32>
    %45 = vector.broadcast %44 : f32 to vector<1x1xf32>
    %c0_12 = arith.constant 0 : index
    %c0_13 = arith.constant 0 : index
    %46 = vector.load %arg3[%c0_12, %c0_13] : memref<8x1xf32, #tpu.memory_space<vmem>>, vector<8x1xf32>
    tpu.vector_store %arg3[%c0_12, %c0_13], %35 {strides = array<i32>} : memref<8x1xf32, #tpu.memory_space<vmem>>, vector<8x1xf32>,
    %c0_14 = arith.constant 0 : index
    %c0_15 = arith.constant 0 : index
    %47 = vector.load %arg4[%c0_14, %c0_15] : memref<1x36xf32, #tpu.memory_space<vmem>>, vector<1x36xf32>
    tpu.vector_store %arg4[%c0_14, %c0_15], %18 {strides = array<i32>} : memref<1x36xf32, #tpu.memory_space<vmem>>, vector<1x36xf32>,
    %cst_16 = arith.constant 1.000000e+00 : f32
    %48 = vector.broadcast %cst_16 : f32 to vector<1x1xf32>
    %49 = arith.divf %48, %45 : vector<1x1xf32>
    %c0_17 = arith.constant 0 : index
    %c0_18 = arith.constant 0 : index
    %50 = vector.load %arg5[%c0_17, %c0_18] : memref<1x1xf32, #tpu.memory_space<vmem>>, vector<1x1xf32>
    tpu.vector_store %arg5[%c0_17, %c0_18], %49 {strides = array<i32>} : memref<1x1xf32, #tpu.memory_space<vmem>>, vector<1x1xf32>,
    return
  }
}

</mosaic_0001>

<llo_original>
// kernel: tpu_custom_call.1
$region0: #{tpu_custom_call.1}
  #allocation0 [shape = 'u32[]', space=smem, size = 0x4, offset = 0x4, fixed_abs, tag = 'smem constant byte address 0x4 - core index']
  #allocation1 [shape = 'u32[144,128]{1,0:T(1,128)}', space=vmem, size = 0x12000, scoped, tag = 'internal scratch']
  %s0 = inlined_call_operand.vmem [shape: f32[8,36], index: 0, kind: input, shape index: {}]
  %s1 = inlined_call_operand.vmem [shape: f32[8,1], index: 1, kind: input, shape index: {}]
  %s2 = inlined_call_operand.vmem [shape: f32[1,36], index: 2, kind: input, shape index: {}]
  %s3 = inlined_call_operand.vmem [shape: f32[8,1], index: 3, kind: output, shape index: {0}]
  %s4 = inlined_call_operand.hbm [shape: f32[1,36], index: 4, kind: output, shape index: {1}]
  %s5 = inlined_call_operand.hbm [shape: f32[1,1], index: 5, kind: output, shape index: {2}]
  %6 = xla_tuple %s3, %s4, %s5
  %s7 = sld [smem:[#allocation0]]
  $region38: #{tpu_custom_call.1} parent=0
    _
  %s9 = ssub.s32 1, %s7
  %s10 = scalar_select 0, %s9, %s7
  $region1: #{tpu_custom_call.1} parent=0
    #allocation2 [shape = 'u8[512]{0}', space=vmem, size = 0x400, scoped, tag = 'output window, operand 1, single buffered']
    #allocation3 [shape = 's32[1]{0}', space=sflag, size = 0x4, scoped, tag = 'scoped memory for tpu_custom_call.1']
    #allocation4 [shape = 'u8[512]{0}', space=vmem, size = 0x400, scoped, tag = 'output window, operand 2, single buffered']
    #allocation5 [shape = 's32[1]{0}', space=sflag, size = 0x4, scoped, tag = 'scoped memory for tpu_custom_call.1']
    %11 = vsyncpa [#allocation3], 0
    %12 = vsyncpa [#allocation5], 0
    // Predicated region
    $region2: #{tpu_custom_call.1} parent=1 // pred_check
      _
    $region3: #{tpu_custom_call.1} parent=1 // pred_check_branch
      %14 = sbr.rel (0) target = $region5
    $region4: #{tpu_custom_call.1} parent=1 // pred_region
      _
    $region5: #{tpu_custom_call.1} parent=1 // pred_fallthru
      _
    // Predicated region
    $region6: #{tpu_custom_call.1} parent=1 // pred_check
      _
    $region7: #{tpu_custom_call.1} parent=1 // pred_check_branch
      %16 = sbr.rel (0) target = $region9
    $region8: #{tpu_custom_call.1} parent=1 // pred_region
      _
    $region9: #{tpu_custom_call.1} parent=1 // pred_fallthru
      _
    // Predicated region
    $region10: #{tpu_custom_call.1} parent=1 // pred_check
      _
    $region11: #{tpu_custom_call.1} parent=1 // pred_check_branch
      %18 = sbr.rel (0) target = $region13
    $region12: #{tpu_custom_call.1} parent=1 // pred_region
      _
    $region13: #{tpu_custom_call.1} parent=1 // pred_fallthru
      _
    %v19 = vld [vmem:[%s0] sm:$0xff]
    %v20 = vld [vmem:[%s1] sm:$0xff]
    %22 = vset.pattern.permute.xlu0 0
    %23 = vperm.xlu0 %22, %v20
    %v24 = vpop.permute.xlu0 %23
    %v26 = vmul.f32 %v19, %v24
    %vm27 = vcmask 293888
    %v28 = vsel %vm27, %v26, 0.0
    %v29 = vrot.slane %v28, 4
    %v30 = vadd.f32 %v28, %v29
    %v31 = vrot.slane %v30, 2
    %v32 = vadd.f32 %v30, %v31
    %v33 = vrot.slane %v32, 1
    %v34 = vadd.f32 %v32, %v33
    %v35 = vmul.f32 %v34, %v34
    %vm36 = vcmask 286720
    %v37 = vsel %vm36, %v35, 0.0
    %38 = vadd.xlane.f32.xlu0 %v37
    %v39 = vpop.xlane.xlu0 %38
    %v40 = vrot.slane %v39, 4
    %v41 = vadd.f32 %v39, %v40
    %v42 = vrot.slane %v41, 2
    %v43 = vadd.f32 %v41, %v42
    %v44 = vrot.slane %v43, 1
    %v45 = vadd.f32 %v43, %v44
    %s46 = vtos %v45
    %v47 = vstv %s46
    %v48 = vrsqrt.pop %v47
    %v49 = vmul.f32 %v47, %v48
    %vm50 = vcmp.eq.f32.partialorder %v47, inf
    %v51 = vsel %vm50, %v47, %v49
    %vm52 = vcmp.eq.f32.partialorder %v47, 0.0
    %v53 = vand.u32 %v47, 2147483648
    %v54 = vsel %vm52, %v53, %v51
    %v55 = vadd.f32 %v54, 1e-12
    %v56 = vrcp.pop %v55
    %v57 = vmul.f32 1.0, %v56
    %v58 = vmul.f32 %v34, %v57
    %v59 = vmul.f32 %v19, %v58
    %v60 = vsel %vm27, %v59, 0.0
    %61 = vadd.xlane.f32.xlu0 %v60
    %v62 = vpop.xlane.xlu0 %61
    %v63 = vmul.f32 %v62, %v62
    %vm64 = vcmask 7168
    %v65 = vsel %vm64, %v63, 0.0
    %66 = vadd.xlane.f32.xlu0 %v65
    %v67 = vpop.xlane.xlu0 %66
    %v68 = vrot.slane %v67, 4
    %v69 = vadd.f32 %v67, %v68
    %v70 = vrot.slane %v69, 2
    %v71 = vadd.f32 %v69, %v70
    %v72 = vrot.slane %v71, 1
    %v73 = vadd.f32 %v71, %v72
    %s74 = vtos %v73
    %v75 = vstv %s74
    %v76 = vrsqrt.pop %v75
    %v77 = vmul.f32 %v75, %v76
    %vm78 = vcmp.eq.f32.partialorder %v75, inf
    %v79 = vsel %vm78, %v75, %v77
    %vm80 = vcmp.eq.f32.partialorder %v75, 0.0
    %v81 = vand.u32 %v75, 2147483648
    %v82 = vsel %vm80, %v81, %v79
    %v83 = vadd.f32 %v82, 1e-12
    %v84 = vrcp.pop %v83
    %v85 = vmul.f32 1.0, %v84
    %v86 = vmul.f32 %v62, %v85
    %v87 = vmul.f32 %v86, %v62
    %v88 = vsel %vm64, %v87, 0.0
    %89 = vadd.xlane.f32.xlu0 %v88
    %v90 = vpop.xlane.xlu0 %89
    %v91 = vrot.slane %v90, 4
    %v92 = vadd.f32 %v90, %v91
    %v93 = vrot.slane %v92, 2
    %v94 = vadd.f32 %v92, %v93
    %v95 = vrot.slane %v94, 1
    %v96 = vadd.f32 %v94, %v95
    %s97 = vtos %v96
    %v98 = vstv %s97
    %99 = vst.msk [vmem:[%s3] sm:$0xff] %vm64, %v86
    %100 = vst.msk [vmem:[#allocation2] sm:$0x1] %vm36, %v58
    %v101 = vrcp.pop %v98
    %v102 = vmul.f32 1.0, %v101
    %vm103 = vcmask 0
    %104 = vst.msk [vmem:[#allocation4] sm:$0x1] %vm103, %v102
    // Predicated region
    $region14: #{tpu_custom_call.1} parent=1 // pred_check
      _
    $region15: #{tpu_custom_call.1} parent=1 // pred_check_branch
      %106 = sbr.rel (0) target = $region17
    $region16: #{tpu_custom_call.1} parent=1 // pred_region
      _
    $region17: #{tpu_custom_call.1} parent=1 // pred_fallthru
      _
    // Predicated region
    $region18: #{tpu_custom_call.1} parent=1 // pred_check
      _
    $region19: #{tpu_custom_call.1} parent=1 // pred_check_branch
      %108 = sbr.rel (0) target = $region21
    $region20: #{tpu_custom_call.1} parent=1 // pred_region
      %s110 = ssub.s32 16, 16
      %111 = vsyncadd [#allocation3], %s110
      %s113 = sshll.u32 [#allocation2], 4
      %s114 = int_to_ptr.vmem [resolvable:$true] %s113
      %116 = dma.vmem_to_hbm [thread:$0]  %s114, 16, %s4, [#allocation3]
    $region21: #{tpu_custom_call.1} parent=1 // pred_fallthru
      _
    // Predicated region
    $region22: #{tpu_custom_call.1} parent=1 // pred_check
      _
    $region23: #{tpu_custom_call.1} parent=1 // pred_check_branch
      %118 = sbr.rel (0) target = $region25
    $region24: #{tpu_custom_call.1} parent=1 // pred_region
      %s120 = ssub.s32 16, 16
      %121 = vsyncadd [#allocation5], %s120
      %s123 = sshll.u32 [#allocation4], 4
      %s124 = int_to_ptr.vmem [resolvable:$true] %s123
      %126 = dma.vmem_to_hbm [thread:$0]  %s124, 16, %s5, [#allocation5]
    $region25: #{tpu_custom_call.1} parent=1 // pred_fallthru
      _
    // Predicated region
    $region26: #{tpu_custom_call.1} parent=1 // pred_check
      _
    $region27: #{tpu_custom_call.1} parent=1 // pred_check_branch
      %128 = sbr.rel (0) target = $region29
    $region28: #{tpu_custom_call.1} parent=1 // pred_region
      _
    $region29: #{tpu_custom_call.1} parent=1 // pred_fallthru
      _
    // Predicated region
    $region30: #{tpu_custom_call.1} parent=1 // pred_check
      _
    $region31: #{tpu_custom_call.1} parent=1 // pred_check_branch
      %130 = sbr.rel (0) target = $region33
    $region32: #{tpu_custom_call.1} parent=1 // pred_region
      %131 = dma.done [#allocation3], 16
    $region33: #{tpu_custom_call.1} parent=1 // pred_fallthru
      _
    // Predicated region
    $region34: #{tpu_custom_call.1} parent=1 // pred_check
      _
    $region35: #{tpu_custom_call.1} parent=1 // pred_check_branch
      %133 = sbr.rel (0) target = $region37
    $region36: #{tpu_custom_call.1} parent=1 // pred_region
      %134 = dma.done [#allocation5], 16
    $region37: #{tpu_custom_call.1} parent=1 // pred_fallthru
      _
    %135 = vsyncpa [#allocation3], 1
    %136 = vsyncpa [#allocation5], 1

</llo_original>
